<compile_context>
chip_gen: v7x
topology: tpu7x:2x2x1
jax: 0.10.0
libtpu: 0.0.40
codegen_flags: <defaults>
</compile_context>

<pallas_src>
import jax
import jax.numpy as jnp
import numpy as np
from jax.experimental import pallas as pl
from jax.experimental.pallas import tpu as pltpu


def make_si_ce_kernel(lambda_c: float, num_classes: int, batch: int,
                      tile_b: int, split_lanes: bool):
    C = num_classes
    C2 = 2 * C
    full_tiles = (batch % tile_b == 0)

    def kernel(x_ref, y_ref, w_ref, b_ref, out_ref,
               acc_base, acc_diss, acc_supp):
        i = pl.program_id(0)
        nsteps = pl.num_programs(0)

        # ---- init VMEM accumulators -------------------------------------------
        @pl.when(i == 0)
        def _init():
            acc_base[...] = jnp.zeros_like(acc_base)   # per-row CE(h2, y) sums
            acc_diss[...] = jnp.zeros_like(acc_diss)   # per-row CE(h2, argmax h1) on support
            acc_supp[...] = jnp.zeros_like(acc_supp)   # per-row support indicator

        # ---- fused MXU matmul: logits = x @ [w1 | w2] + [b1 | b2]  (f32 acc) ---
        logits = jnp.dot(x_ref[...], w_ref[...],
                         preferred_element_type=jnp.float32)
        logits = logits + b_ref[...]                   # (tile_b, 2C) f32

        y = y_ref[...]                                 # (tile_b, 1) int32
        neg_inf = jnp.float32(-jnp.inf)

        if split_lanes:
            # C is 128-aligned: static tile-aligned lane slices (no relayout);
            # halves the epilogue width vs. masking over 2C lanes.
            l1 = logits[:, :C]
            l2 = logits[:, C:]
            lane = jax.lax.broadcasted_iota(jnp.int32, (1, C), 1)
            # h1 predicted label: argmax with first-index tie-break (torch.argmax)
            m1 = jnp.max(l1, axis=-1, keepdims=True)
            h1_label = jnp.min(jnp.where(l1 == m1, lane, C),
                               axis=-1, keepdims=True)
            # log-sum-exp of h2 logits (shared by both cross-entropies)
            m2 = jnp.max(l2, axis=-1, keepdims=True)
            sumexp2 = jnp.sum(jnp.exp(l2 - m2), axis=-1, keepdims=True)
            lse2 = m2 + jnp.log(sumexp2)
            picked_y = jnp.sum(jnp.where(lane == y, l2, 0.0),
                               axis=-1, keepdims=True)        # l2[i, y_i]
            picked_h1 = jnp.sum(jnp.where(lane == h1_label, l2, 0.0),
                                axis=-1, keepdims=True)       # l2[i, argmax h1_i]
        else:
            # small / unaligned C: fused lanes with (1, 2C) broadcast masks.
            lane = jax.lax.broadcasted_iota(jnp.int32, (1, C2), 1)
            in_h1 = lane < C
            in_h2 = jnp.logical_not(in_h1)
            m1 = jnp.max(jnp.where(in_h1, logits, neg_inf),
                         axis=-1, keepdims=True)
            h1_label = jnp.min(jnp.where(in_h1 & (logits == m1), lane, C2),
                               axis=-1, keepdims=True)
            m2 = jnp.max(jnp.where(in_h2, logits, neg_inf),
                         axis=-1, keepdims=True)
            sumexp2 = jnp.sum(jnp.exp(jnp.where(in_h2, logits - m2, neg_inf)),
                              axis=-1, keepdims=True)
            lse2 = m2 + jnp.log(sumexp2)
            picked_y = jnp.sum(jnp.where(lane == y + C, logits, 0.0),
                               axis=-1, keepdims=True)
            picked_h1 = jnp.sum(jnp.where(lane == h1_label + C, logits, 0.0),
                                axis=-1, keepdims=True)

        ce_base = lse2 - picked_y
        ce_diss = lse2 - picked_h1
        correct = h1_label == y

        if full_tiles:
            base_contrib = ce_base
            support = correct
        else:
            # mask padded rows of a partial last tile
            row = jax.lax.broadcasted_iota(jnp.int32, (tile_b, 1), 0)
            valid = (i * tile_b + row) < batch
            base_contrib = jnp.where(valid, ce_base, 0.0)
            support = valid & correct

        # per-row VMEM accumulation: no cross-row reduce, no SMEM RMW per step
        acc_base[...] += base_contrib
        acc_diss[...] += jnp.where(support, ce_diss, 0.0)
        acc_supp[...] += support.astype(jnp.float32)

        # ---- finalize: single cross-row reduction + divides --------------------
        @pl.when(i == nsteps - 1)
        def _finalize():
            s_base = jnp.sum(acc_base[...])
            s_diss = jnp.sum(acc_diss[...])
            n_supp = jnp.sum(acc_supp[...])
            base_loss = s_base / jnp.float32(batch)
            dissonance = jnp.where(n_supp > 0.0,
                                   s_diss / jnp.maximum(n_supp, 1.0),
                                   jnp.float32(0.0))
            out_ref[0, 0] = base_loss + jnp.float32(lambda_c) * dissonance

    return kernel


def _vmem_budget_bytes():
    """~75% of physical VMEM: 48 MiB on v7x (64 MiB), 96 MiB on v5e/v6e (128 MiB)."""
    try:
        cap = int(pltpu.get_tpu_info().vmem_capacity_bytes)
    except Exception:
        cap = 64 * 1024 * 1024   # conservative (v7x-sized) fallback
    return (cap * 3) // 4


def _pick_tile_b(batch, requested, footprint, budget):
    tb = int(min(requested, batch))
    if tb < batch or footprint(tb) > budget:
        tb = max(256, (tb // 256) * 256)        # MXU-aligned batch tile
        while tb > 256 and footprint(tb) > budget:
            tb -= 256
        tb = min(tb, batch)                      # tiny batch: one full tile
    return tb


def strict_imitation_ce_loss(x, y, w1, b1, w2, b2, lambda_c, *,
                             tile_b=2048, compute_dtype=jnp.bfloat16):
    B, D = x.shape
    C = w1.shape[1]
    C2 = 2 * C
    itemsize = jnp.dtype(compute_dtype).itemsize

    vmem_budget = _vmem_budget_bytes()

    def footprint(tb):
        x_buf = 2 * tb * D * itemsize            # double-buffered x tiles
        y_buf = 2 * tb * 128 * 4                 # y tiles (lane-padded)
        w_buf = D * C2 * itemsize                # single-buffered fused weights
        b_buf = max(C2, 128) * 4
        acc = 3 * tb * 128 * 4                   # VMEM accumulators (lane-padded)
        epi = 4 * tb * C2 * 4                    # f32 logits + epilogue temporaries
        return x_buf + y_buf + w_buf + b_buf + acc + epi

    tile_b = _pick_tile_b(B, tile_b, footprint, vmem_budget)
    grid = (pl.cdiv(B, tile_b),)

    # fuse the two classifiers into one weight matrix / bias row
    w = jnp.concatenate([w1, w2], axis=1).astype(compute_dtype)           # (D, 2C)
    b = jnp.concatenate([b1.reshape(1, C), b2.reshape(1, C)],
                        axis=1).astype(jnp.float32)                       # (1, 2C)
    x_in = x.astype(compute_dtype)                                        # bf16 HBM stream
    y_in = y.reshape(B, 1).astype(jnp.int32)

    split_lanes = (C % 128 == 0) and C >= 128
    kernel = make_si_ce_kernel(float(lambda_c), C, B, tile_b, split_lanes)

    cost = pl.CostEstimate(
        flops=2 * B * D * C2,
        transcendentals=B * (C2 + 1),
        bytes_accessed=(B * D + D * C2) * itemsize + C2 * 4 + B * 4 + 4,
    )
    vmem_limit = int(min(vmem_budget, 100 * 1024 * 1024))

    def build(single_buffer_weights):
        wkw = dict(pipeline_mode=pl.Buffered(1)) if single_buffer_weights else {}
        return pl.pallas_call(
            kernel,
            out_shape=jax.ShapeDtypeStruct((1, 1), jnp.float32),
            grid=grid,
            in_specs=[
                pl.BlockSpec((tile_b, D), lambda i: (i, 0)),       # x tile (pipelined)
                pl.BlockSpec((tile_b, 1), lambda i: (i, 0)),       # y tile (pipelined)
                pl.BlockSpec((D, C2), lambda i: (0, 0), **wkw),    # fused W, resident
                pl.BlockSpec((1, C2), lambda i: (0, 0), **wkw),    # fused b, resident
            ],
            out_specs=pl.BlockSpec(memory_space=pltpu.MemorySpace.SMEM),
            scratch_shapes=[pltpu.VMEM((tile_b, 1), jnp.float32)] * 3,
            compiler_params=pltpu.CompilerParams(
                dimension_semantics=("arbitrary",),                # sequential reduction
                vmem_limit_bytes=vmem_limit,
            ),
            cost_estimate=cost,
        )

    try:
        out = jax.block_until_ready(build(True)(x_in, y_in, w, b))
    except Exception:
        # pipeline_mode=pl.Buffered(1) unsupported on this jax/libtpu combination;
        # fall back to default double-buffered resident weights (still correct).
        out = jax.block_until_ready(build(False)(x_in, y_in, w, b))
    return out[0, 0]


def _reference_loss(x, y, w1, b1, w2, b2, lambda_c, compute_dtype=jnp.bfloat16):
    # pure-JAX reference mirroring the PyTorch forward (same bf16 matmul inputs)
    xw = x.astype(compute_dtype)
    l1 = jnp.dot(xw, w1.astype(compute_dtype),
                 preferred_element_type=jnp.float32) + b1.astype(jnp.float32)
    l2 = jnp.dot(xw, w2.astype(compute_dtype),
                 preferred_element_type=jnp.float32) + b2.astype(jnp.float32)
    h1_label = jnp.argmax(l1, axis=-1)
    lse2 = jax.scipy.special.logsumexp(l2, axis=-1)
    ce_base = lse2 - jnp.take_along_axis(l2, y[:, None], axis=-1)[:, 0]
    ce_diss = lse2 - jnp.take_along_axis(l2, h1_label[:, None], axis=-1)[:, 0]
    mask = (h1_label == y).astype(jnp.float32)
    n = jnp.sum(mask)
    diss = jnp.where(n > 0, jnp.sum(mask * ce_diss) / jnp.maximum(n, 1.0), 0.0)
    return jnp.mean(ce_base) + lambda_c * diss


if __name__ == "__main__":
    lambda_c = 0.5
    k_small, k_multi, k_wide = jax.random.split(jax.random.PRNGKey(0), 3)

    def make_inputs(key, B, D, C):
        kx, ky, kw1, kb1, kw2, kb2 = jax.random.split(key, 6)
        x = jax.random.normal(kx, (B, D), dtype=jnp.float32)
        y = jax.random.randint(ky, (B,), 0, C, dtype=jnp.int32)
        w1 = jax.random.normal(kw1, (D, C), dtype=jnp.float32) * 0.1
        b1 = jax.random.normal(kb1, (C,), dtype=jnp.float32) * 0.01
        w2 = jax.random.normal(kw2, (D, C), dtype=jnp.float32) * 0.1
        b2 = jax.random.normal(kb2, (C,), dtype=jnp.float32) * 0.01
        return x, y, w1, b1, w2, b2

    def check(args, **kw):
        loss = jax.block_until_ready(strict_imitation_ce_loss(*args, lambda_c, **kw))
        ref = _reference_loss(*args, lambda_c)
        np.testing.assert_allclose(np.asarray(loss), np.asarray(ref),
                                   rtol=1e-3, atol=1e-3)

    # 1) small single-tile case (fused lane-mask epilogue, 2C < 128)
    check(make_inputs(k_small, 16, 32, 16))

    # 2) multi-step grid with a masked partial last tile (576 = 2*256 + 64)
    check(make_inputs(k_multi, 576, 32, 16), tile_b=256)

    # 3) 128-aligned class count -> static lane-slice epilogue path
    check(make_inputs(k_wide, 64, 32, 128))

    print("KERNEL_OK")
</pallas_src>

<mosaic_0001>
module attributes {stable_mosaic.version = 11 : i64} {
  func.func @kernel(%arg0: i32, %arg1: memref<16x32xbf16, #tpu.memory_space<vmem>>, %arg2: memref<16x1xi32, #tpu.memory_space<vmem>>, %arg3: memref<32x32xbf16, #tpu.memory_space<vmem>>, %arg4: memref<1x32xf32, #tpu.memory_space<vmem>>, %arg5: memref<1x1xf32, #tpu.memory_space<smem>>, %arg6: memref<16x1xf32, #tpu.memory_space<vmem>>, %arg7: memref<16x1xf32, #tpu.memory_space<vmem>>, %arg8: memref<16x1xf32, #tpu.memory_space<vmem>>) attributes {dimension_semantics = [#tpu.dimension_semantics<arbitrary>], iteration_bounds = array<i64: 1>, scalar_prefetch = 0 : i64, scratch_operands = 3 : i64, tpu.core_type = #tpu.core_type<tc>, window_params = [{transform_indices = @transform_0, window_bounds = array<i64: 16, 32>}, {transform_indices = @transform_1, window_bounds = array<i64: 16, 1>}, {pipeline_mode = #tpu.pipeline_mode<synchronous>, transform_indices = @transform_2, window_bounds = array<i64: 32, 32>}, {pipeline_mode = #tpu.pipeline_mode<synchronous>, transform_indices = @transform_3, window_bounds = array<i64: 1, 32>}, {transform_indices = @transform_4, window_bounds = array<i64: 1, 1>}]} {
    %c0_i32 = arith.constant 0 : i32
    %0 = arith.cmpi eq, %arg0, %c0_i32 : i32
    %1 = arith.extui %0 : i1 to i32
    %c0_i32_0 = arith.constant 0 : i32
    %2 = arith.cmpi ne, %1, %c0_i32_0 : i32
    scf.if %2 {
      %cst_37 = arith.constant 0.000000e+00 : f32
      %84 = vector.broadcast %cst_37 : f32 to vector<16x1xf32>
      %c0_38 = arith.constant 0 : index
      %c0_39 = arith.constant 0 : index
      %85 = vector.load %arg6[%c0_38, %c0_39] : memref<16x1xf32, #tpu.memory_space<vmem>>, vector<16x1xf32>
      tpu.vector_store %arg6[%c0_38, %c0_39], %84 {strides = array<i32>} : memref<16x1xf32, #tpu.memory_space<vmem>>, vector<16x1xf32>,
      %cst_40 = arith.constant 0.000000e+00 : f32
      %86 = vector.broadcast %cst_40 : f32 to vector<16x1xf32>
      %c0_41 = arith.constant 0 : index
      %c0_42 = arith.constant 0 : index
      %87 = vector.load %arg7[%c0_41, %c0_42] : memref<16x1xf32, #tpu.memory_space<vmem>>, vector<16x1xf32>
      tpu.vector_store %arg7[%c0_41, %c0_42], %86 {strides = array<i32>} : memref<16x1xf32, #tpu.memory_space<vmem>>, vector<16x1xf32>,
      %cst_43 = arith.constant 0.000000e+00 : f32
      %88 = vector.broadcast %cst_43 : f32 to vector<16x1xf32>
      %c0_44 = arith.constant 0 : index
      %c0_45 = arith.constant 0 : index
      %89 = vector.load %arg8[%c0_44, %c0_45] : memref<16x1xf32, #tpu.memory_space<vmem>>, vector<16x1xf32>
      tpu.vector_store %arg8[%c0_44, %c0_45], %88 {strides = array<i32>} : memref<16x1xf32, #tpu.memory_space<vmem>>, vector<16x1xf32>,
    } else {
    }
    %c0 = arith.constant 0 : index
    %c0_1 = arith.constant 0 : index
    %3 = vector.load %arg1[%c0, %c0_1] : memref<16x32xbf16, #tpu.memory_space<vmem>>, vector<16x32xbf16>
    %c0_2 = arith.constant 0 : index
    %c0_3 = arith.constant 0 : index
    %4 = vector.load %arg3[%c0_2, %c0_3] : memref<32x32xbf16, #tpu.memory_space<vmem>>, vector<32x32xbf16>
    %cst = arith.constant dense<0.000000e+00> : vector<16x32xf32>
    %5 = tpu.matmul %3, %4, %cst {dimension_numbers = #tpu.dot_dimension_numbers<[1], [0], [0], [1], [0, 0, 1, 1], [], []>} : vector<16x32xbf16>, vector<32x32xbf16>, vector<16x32xf32> -> vector<16x32xf32>
    %c0_4 = arith.constant 0 : index
    %c0_5 = arith.constant 0 : index
    %6 = vector.load %arg4[%c0_4, %c0_5] : memref<1x32xf32, #tpu.memory_space<vmem>>, vector<1x32xf32>
    %7 = vector.broadcast %6 : vector<1x32xf32> to vector<16x32xf32>
    %8 = arith.addf %5, %7 : vector<16x32xf32>
    %c0_6 = arith.constant 0 : index
    %c0_7 = arith.constant 0 : index
    %9 = vector.load %arg2[%c0_6, %c0_7] : memref<16x1xi32, #tpu.memory_space<vmem>>, vector<16x1xi32>
    %10 = tpu.iota {dimensions = array<i32: 1>} : vector<1x32xi32>
    %c16_i32 = arith.constant 16 : i32
    %11 = vector.broadcast %c16_i32 : i32 to vector<1x32xi32>
    %12 = arith.cmpi slt, %10, %11 : vector<1x32xi32>
    %cst_8 = arith.constant dense<true> : vector<1x32xi1>
    %13 = arith.xori %12, %cst_8 : vector<1x32xi1>
    %cst_9 = arith.constant 0xFF800000 : f32
    %14 = vector.shape_cast %12 : vector<1x32xi1> to vector<1x32xi1>
    %15 = vector.broadcast %14 : vector<1x32xi1> to vector<16x32xi1>
    %16 = vector.broadcast %cst_9 : f32 to vector<16x32xf32>
    %17 = arith.select %15, %8, %16 : vector<16x32xi1>, vector<16x32xf32>
    %cst_10 = arith.constant dense<0xFF800000> : vector<16xf32>
    %18 = vector.multi_reduction <maximumf>, %17, %cst_10 [1] : vector<16x32xf32> to vector<16xf32>
    %19 = vector.shape_cast %18 : vector<16xf32> to vector<16x1xf32>
    %20 = vector.broadcast %19 : vector<16x1xf32> to vector<16x32xf32>
    %21 = arith.cmpf oeq, %8, %20 : vector<16x32xf32>
    %22 = vector.broadcast %12 : vector<1x32xi1> to vector<16x32xi1>
    %23 = arith.andi %22, %21 : vector<16x32xi1>
    %c32_i32 = arith.constant 32 : i32
    %24 = vector.shape_cast %10 : vector<1x32xi32> to vector<1x32xi32>
    %25 = vector.broadcast %24 : vector<1x32xi32> to vector<16x32xi32>
    %26 = vector.broadcast %c32_i32 : i32 to vector<16x32xi32>
    %27 = arith.select %23, %25, %26 : vector<16x32xi1>, vector<16x32xi32>
    %cst_11 = arith.constant dense<2147483647> : vector<16xi32>
    %28 = vector.multi_reduction <minsi>, %27, %cst_11 [1] : vector<16x32xi32> to vector<16xi32>
    %29 = vector.shape_cast %28 : vector<16xi32> to vector<16x1xi32>
    %cst_12 = arith.constant 0xFF800000 : f32
    %30 = vector.shape_cast %13 : vector<1x32xi1> to vector<1x32xi1>
    %31 = vector.broadcast %30 : vector<1x32xi1> to vector<16x32xi1>
    %32 = vector.broadcast %cst_12 : f32 to vector<16x32xf32>
    %33 = arith.select %31, %8, %32 : vector<16x32xi1>, vector<16x32xf32>
    %cst_13 = arith.constant dense<0xFF800000> : vector<16xf32>
    %34 = vector.multi_reduction <maximumf>, %33, %cst_13 [1] : vector<16x32xf32> to vector<16xf32>
    %35 = vector.shape_cast %34 : vector<16xf32> to vector<16x1xf32>
    %36 = vector.broadcast %35 : vector<16x1xf32> to vector<16x32xf32>
    %37 = arith.subf %8, %36 : vector<16x32xf32>
    %cst_14 = arith.constant 0xFF800000 : f32
    %38 = vector.shape_cast %13 : vector<1x32xi1> to vector<1x32xi1>
    %39 = vector.broadcast %38 : vector<1x32xi1> to vector<16x32xi1>
    %40 = vector.broadcast %cst_14 : f32 to vector<16x32xf32>
    %41 = arith.select %39, %37, %40 : vector<16x32xi1>, vector<16x32xf32>
    %42 = math.exp %41 : vector<16x32xf32>
    %cst_15 = arith.constant dense<0.000000e+00> : vector<16xf32>
    %43 = vector.multi_reduction <add>, %42, %cst_15 [1] : vector<16x32xf32> to vector<16xf32>
    %44 = vector.shape_cast %43 : vector<16xf32> to vector<16x1xf32>
    %45 = math.log %44 : vector<16x1xf32>
    %46 = arith.addf %35, %45 : vector<16x1xf32>
    %c16_i32_16 = arith.constant 16 : i32
    %47 = vector.broadcast %c16_i32_16 : i32 to vector<16x1xi32>
    %48 = arith.addi %9, %47 : vector<16x1xi32>
    %49 = vector.broadcast %10 : vector<1x32xi32> to vector<16x32xi32>
    %50 = vector.broadcast %48 : vector<16x1xi32> to vector<16x32xi32>
    %51 = arith.cmpi eq, %49, %50 : vector<16x32xi32>
    %cst_17 = arith.constant 0.000000e+00 : f32
    %52 = vector.broadcast %cst_17 : f32 to vector<16x32xf32>
    %53 = arith.select %51, %8, %52 : vector<16x32xi1>, vector<16x32xf32>
    %cst_18 = arith.constant dense<0.000000e+00> : vector<16xf32>
    %54 = vector.multi_reduction <add>, %53, %cst_18 [1] : vector<16x32xf32> to vector<16xf32>
    %55 = vector.shape_cast %54 : vector<16xf32> to vector<16x1xf32>
    %c16_i32_19 = arith.constant 16 : i32
    %56 = vector.broadcast %c16_i32_19 : i32 to vector<16x1xi32>
    %57 = arith.addi %29, %56 : vector<16x1xi32>
    %58 = vector.broadcast %10 : vector<1x32xi32> to vector<16x32xi32>
    %59 = vector.broadcast %57 : vector<16x1xi32> to vector<16x32xi32>
    %60 = arith.cmpi eq, %58, %59 : vector<16x32xi32>
    %cst_20 = arith.constant 0.000000e+00 : f32
    %61 = vector.broadcast %cst_20 : f32 to vector<16x32xf32>
    %62 = arith.select %60, %8, %61 : vector<16x32xi1>, vector<16x32xf32>
    %cst_21 = arith.constant dense<0.000000e+00> : vector<16xf32>
    %63 = vector.multi_reduction <add>, %62, %cst_21 [1] : vector<16x32xf32> to vector<16xf32>
    %64 = vector.shape_cast %63 : vector<16xf32> to vector<16x1xf32>
    %65 = arith.subf %46, %55 : vector<16x1xf32>
    %66 = arith.subf %46, %64 : vector<16x1xf32>
    %67 = arith.cmpi eq, %29, %9 : vector<16x1xi32>
    %c0_22 = arith.constant 0 : index
    %c0_23 = arith.constant 0 : index
    %68 = vector.load %arg6[%c0_22, %c0_23] : memref<16x1xf32, #tpu.memory_space<vmem>>, vector<16x1xf32>
    %69 = arith.addf %68, %65 : vector<16x1xf32>
    %c0_24 = arith.constant 0 : index
    %c0_25 = arith.constant 0 : index
    %70 = vector.load %arg6[%c0_24, %c0_25] : memref<16x1xf32, #tpu.memory_space<vmem>>, vector<16x1xf32>
    tpu.vector_store %arg6[%c0_24, %c0_25], %69 {strides = array<i32>} : memref<16x1xf32, #tpu.memory_space<vmem>>, vector<16x1xf32>,
    %c0_26 = arith.constant 0 : index
    %c0_27 = arith.constant 0 : index
    %71 = vector.load %arg7[%c0_26, %c0_27] : memref<16x1xf32, #tpu.memory_space<vmem>>, vector<16x1xf32>
    %cst_28 = arith.constant 0.000000e+00 : f32
    %72 = vector.broadcast %cst_28 : f32 to vector<16x1xf32>
    %73 = arith.select %67, %66, %72 : vector<16x1xi1>, vector<16x1xf32>
    %74 = arith.addf %71, %73 : vector<16x1xf32>
    %c0_29 = arith.constant 0 : index
    %c0_30 = arith.constant 0 : index
    %75 = vector.load %arg7[%c0_29, %c0_30] : memref<16x1xf32, #tpu.memory_space<vmem>>, vector<16x1xf32>
    tpu.vector_store %arg7[%c0_29, %c0_30], %74 {strides = array<i32>} : memref<16x1xf32, #tpu.memory_space<vmem>>, vector<16x1xf32>,
    %c0_31 = arith.constant 0 : index
    %c0_32 = arith.constant 0 : index
    %76 = vector.load %arg8[%c0_31, %c0_32] : memref<16x1xf32, #tpu.memory_space<vmem>>, vector<16x1xf32>
    %77 = arith.extui %67 : vector<16x1xi1> to vector<16x1xi32>
    %78 = arith.sitofp %77 : vector<16x1xi32> to vector<16x1xf32>
    %79 = arith.addf %76, %78 : vector<16x1xf32>
    %c0_33 = arith.constant 0 : index
    %c0_34 = arith.constant 0 : index
    %80 = vector.load %arg8[%c0_33, %c0_34] : memref<16x1xf32, #tpu.memory_space<vmem>>, vector<16x1xf32>
    tpu.vector_store %arg8[%c0_33, %c0_34], %79 {strides = array<i32>} : memref<16x1xf32, #tpu.memory_space<vmem>>, vector<16x1xf32>,
    %c0_i32_35 = arith.constant 0 : i32
    %81 = arith.cmpi eq, %arg0, %c0_i32_35 : i32
    %82 = arith.extui %81 : i1 to i32
    %c0_i32_36 = arith.constant 0 : i32
    %83 = arith.cmpi ne, %82, %c0_i32_36 : i32
    scf.if %83 {
      %c0_37 = arith.constant 0 : index
      %c0_38 = arith.constant 0 : index
      %84 = vector.load %arg6[%c0_37, %c0_38] : memref<16x1xf32, #tpu.memory_space<vmem>>, vector<16x1xf32>
      %85 = vector.shape_cast %84 : vector<16x1xf32> to vector<1x16x1xf32>
      %cst_39 = arith.constant dense<0.000000e+00> : vector<1xf32>
      %86 = vector.multi_reduction <add>, %85, %cst_39 [1, 2] : vector<1x16x1xf32> to vector<1xf32>
      %87 = vector.shape_cast %86 : vector<1xf32> to vector<1x1x1xf32>
      %88 = vector.extract %87[0, 0, 0] : f32 from vector<1x1x1xf32>
      %c0_40 = arith.constant 0 : index
      %c0_41 = arith.constant 0 : index
      %89 = vector.load %arg7[%c0_40, %c0_41] : memref<16x1xf32, #tpu.memory_space<vmem>>, vector<16x1xf32>
      %90 = vector.shape_cast %89 : vector<16x1xf32> to vector<1x16x1xf32>
      %cst_42 = arith.constant dense<0.000000e+00> : vector<1xf32>
      %91 = vector.multi_reduction <add>, %90, %cst_42 [1, 2] : vector<1x16x1xf32> to vector<1xf32>
      %92 = vector.shape_cast %91 : vector<1xf32> to vector<1x1x1xf32>
      %93 = vector.extract %92[0, 0, 0] : f32 from vector<1x1x1xf32>
      %c0_43 = arith.constant 0 : index
      %c0_44 = arith.constant 0 : index
      %94 = vector.load %arg8[%c0_43, %c0_44] : memref<16x1xf32, #tpu.memory_space<vmem>>, vector<16x1xf32>
      %95 = vector.shape_cast %94 : vector<16x1xf32> to vector<1x16x1xf32>
      %cst_45 = arith.constant dense<0.000000e+00> : vector<1xf32>
      %96 = vector.multi_reduction <add>, %95, %cst_45 [1, 2] : vector<1x16x1xf32> to vector<1xf32>
      %97 = vector.shape_cast %96 : vector<1xf32> to vector<1x1x1xf32>
      %98 = vector.extract %97[0, 0, 0] : f32 from vector<1x1x1xf32>
      %cst_46 = arith.constant 1.600000e+01 : f32
      %99 = arith.divf %88, %cst_46 : f32
      %cst_47 = arith.constant 0.000000e+00 : f32
      %100 = arith.cmpf ogt, %98, %cst_47 : f32
      %cst_48 = arith.constant 1.000000e+00 : f32
      %101 = arith.maximumf %98, %cst_48 : f32
      %102 = arith.divf %93, %101 : f32
      %cst_49 = arith.constant 0.000000e+00 : f32
      %103 = arith.select %100, %102, %cst_49 : f32
      %cst_50 = arith.constant 5.000000e-01 : f32
      %104 = arith.mulf %cst_50, %103 : f32
      %105 = arith.addf %99, %104 : f32
      %c0_51 = arith.constant 0 : index
      %c0_52 = arith.constant 0 : index
      %106 = memref.load %arg5[%c0_51, %c0_52] : memref<1x1xf32, #tpu.memory_space<smem>>
      memref.store %105, %arg5[%c0_51, %c0_52] : memref<1x1xf32, #tpu.memory_space<smem>>
    } else {
    }
    return
  }
  func.func @transform_0(%arg0: i32) -> (i32, i32) {
    %c0_i32 = arith.constant 0 : i32
    %c0_i32_0 = arith.constant 0 : i32
    return %arg0, %c0_i32 : i32, i32
  }
  func.func @transform_1(%arg0: i32) -> (i32, i32) {
    %c0_i32 = arith.constant 0 : i32
    %c0_i32_0 = arith.constant 0 : i32
    return %arg0, %c0_i32 : i32, i32
  }
  func.func @transform_2(%arg0: i32) -> (i32, i32) {
    %c0_i32 = arith.constant 0 : i32
    %c0_i32_0 = arith.constant 0 : i32
    %c0_i32_1 = arith.constant 0 : i32
    return %c0_i32, %c0_i32_0 : i32, i32
  }
  func.func @transform_3(%arg0: i32) -> (i32, i32) {
    %c0_i32 = arith.constant 0 : i32
    %c0_i32_0 = arith.constant 0 : i32
    %c0_i32_1 = arith.constant 0 : i32
    return %c0_i32, %c0_i32_0 : i32, i32
  }
  func.func @transform_4(%arg0: i32) -> (i32, i32) {
    %c0_i32 = arith.constant 0 : i32
    %c0_i32_0 = arith.constant 0 : i32
    %c0_i32_1 = arith.constant 0 : i32
    return %c0_i32, %c0_i32_0 : i32, i32
  }
}

module attributes {stable_mosaic.version = 11 : i64} {
  func.func @kernel(%arg0: i32, %arg1: memref<16x32xbf16, #tpu.memory_space<vmem>>, %arg2: memref<16x1xi32, #tpu.memory_space<vmem>>, %arg3: memref<32x32xbf16, #tpu.memory_space<vmem>>, %arg4: memref<1x32xf32, #tpu.memory_space<vmem>>, %arg5: memref<1x1xf32, #tpu.memory_space<smem>>, %arg6: memref<16x1xf32, #tpu.memory_space<vmem>>, %arg7: memref<16x1xf32, #tpu.memory_space<vmem>>, %arg8: memref<16x1xf32, #tpu.memory_space<vmem>>) attributes {dimension_semantics = [#tpu.dimension_semantics<arbitrary>], iteration_bounds = array<i64: 1>, scalar_prefetch = 0 : i64, scratch_operands = 3 : i64, tpu.core_type = #tpu.core_type<tc>, window_params = [{transform_indices = @transform_0, window_bounds = array<i64: 16, 32>}, {transform_indices = @transform_1, window_bounds = array<i64: 16, 1>}, {pipeline_mode = #tpu.pipeline_mode<synchronous>, transform_indices = @transform_2, window_bounds = array<i64: 32, 32>}, {pipeline_mode = #tpu.pipeline_mode<synchronous>, transform_indices = @transform_3, window_bounds = array<i64: 1, 32>}, {transform_indices = @transform_4, window_bounds = array<i64: 1, 1>}]} {
    %c0_i32 = arith.constant 0 : i32
    %0 = arith.cmpi eq, %arg0, %c0_i32 : i32
    %1 = arith.extui %0 : i1 to i32
    %c0_i32_0 = arith.constant 0 : i32
    %2 = arith.cmpi ne, %1, %c0_i32_0 : i32
    scf.if %2 {
      %cst_37 = arith.constant 0.000000e+00 : f32
      %84 = vector.broadcast %cst_37 : f32 to vector<16x1xf32>
      %c0_38 = arith.constant 0 : index
      %c0_39 = arith.constant 0 : index
      %85 = vector.load %arg6[%c0_38, %c0_39] : memref<16x1xf32, #tpu.memory_space<vmem>>, vector<16x1xf32>
      tpu.vector_store %arg6[%c0_38, %c0_39], %84 {strides = array<i32>} : memref<16x1xf32, #tpu.memory_space<vmem>>, vector<16x1xf32>,
      %cst_40 = arith.constant 0.000000e+00 : f32
      %86 = vector.broadcast %cst_40 : f32 to vector<16x1xf32>
      %c0_41 = arith.constant 0 : index
      %c0_42 = arith.constant 0 : index
      %87 = vector.load %arg7[%c0_41, %c0_42] : memref<16x1xf32, #tpu.memory_space<vmem>>, vector<16x1xf32>
      tpu.vector_store %arg7[%c0_41, %c0_42], %86 {strides = array<i32>} : memref<16x1xf32, #tpu.memory_space<vmem>>, vector<16x1xf32>,
      %cst_43 = arith.constant 0.000000e+00 : f32
      %88 = vector.broadcast %cst_43 : f32 to vector<16x1xf32>
      %c0_44 = arith.constant 0 : index
      %c0_45 = arith.constant 0 : index
      %89 = vector.load %arg8[%c0_44, %c0_45] : memref<16x1xf32, #tpu.memory_space<vmem>>, vector<16x1xf32>
      tpu.vector_store %arg8[%c0_44, %c0_45], %88 {strides = array<i32>} : memref<16x1xf32, #tpu.memory_space<vmem>>, vector<16x1xf32>,
    } else {
    }
    %c0 = arith.constant 0 : index
    %c0_1 = arith.constant 0 : index
    %3 = vector.load %arg1[%c0, %c0_1] : memref<16x32xbf16, #tpu.memory_space<vmem>>, vector<16x32xbf16>
    %c0_2 = arith.constant 0 : index
    %c0_3 = arith.constant 0 : index
    %4 = vector.load %arg3[%c0_2, %c0_3] : memref<32x32xbf16, #tpu.memory_space<vmem>>, vector<32x32xbf16>
    %cst = arith.constant dense<0.000000e+00> : vector<16x32xf32>
    %5 = tpu.matmul %3, %4, %cst {dimension_numbers = #tpu.dot_dimension_numbers<[1], [0], [0], [1], [0, 0, 1, 1], [], []>} : vector<16x32xbf16>, vector<32x32xbf16>, vector<16x32xf32> -> vector<16x32xf32>
    %c0_4 = arith.constant 0 : index
    %c0_5 = arith.constant 0 : index
    %6 = vector.load %arg4[%c0_4, %c0_5] : memref<1x32xf32, #tpu.memory_space<vmem>>, vector<1x32xf32>
    %7 = vector.broadcast %6 : vector<1x32xf32> to vector<16x32xf32>
    %8 = arith.addf %5, %7 : vector<16x32xf32>
    %c0_6 = arith.constant 0 : index
    %c0_7 = arith.constant 0 : index
    %9 = vector.load %arg2[%c0_6, %c0_7] : memref<16x1xi32, #tpu.memory_space<vmem>>, vector<16x1xi32>
    %10 = tpu.iota {dimensions = array<i32: 1>} : vector<1x32xi32>
    %c16_i32 = arith.constant 16 : i32
    %11 = vector.broadcast %c16_i32 : i32 to vector<1x32xi32>
    %12 = arith.cmpi slt, %10, %11 : vector<1x32xi32>
    %cst_8 = arith.constant dense<true> : vector<1x32xi1>
    %13 = arith.xori %12, %cst_8 : vector<1x32xi1>
    %cst_9 = arith.constant 0xFF800000 : f32
    %14 = vector.shape_cast %12 : vector<1x32xi1> to vector<1x32xi1>
    %15 = vector.broadcast %14 : vector<1x32xi1> to vector<16x32xi1>
    %16 = vector.broadcast %cst_9 : f32 to vector<16x32xf32>
    %17 = arith.select %15, %8, %16 : vector<16x32xi1>, vector<16x32xf32>
    %cst_10 = arith.constant dense<0xFF800000> : vector<16xf32>
    %18 = vector.multi_reduction <maximumf>, %17, %cst_10 [1] : vector<16x32xf32> to vector<16xf32>
    %19 = vector.shape_cast %18 : vector<16xf32> to vector<16x1xf32>
    %20 = vector.broadcast %19 : vector<16x1xf32> to vector<16x32xf32>
    %21 = arith.cmpf oeq, %8, %20 : vector<16x32xf32>
    %22 = vector.broadcast %12 : vector<1x32xi1> to vector<16x32xi1>
    %23 = arith.andi %22, %21 : vector<16x32xi1>
    %c32_i32 = arith.constant 32 : i32
    %24 = vector.shape_cast %10 : vector<1x32xi32> to vector<1x32xi32>
    %25 = vector.broadcast %24 : vector<1x32xi32> to vector<16x32xi32>
    %26 = vector.broadcast %c32_i32 : i32 to vector<16x32xi32>
    %27 = arith.select %23, %25, %26 : vector<16x32xi1>, vector<16x32xi32>
    %cst_11 = arith.constant dense<2147483647> : vector<16xi32>
    %28 = vector.multi_reduction <minsi>, %27, %cst_11 [1] : vector<16x32xi32> to vector<16xi32>
    %29 = vector.shape_cast %28 : vector<16xi32> to vector<16x1xi32>
    %cst_12 = arith.constant 0xFF800000 : f32
    %30 = vector.shape_cast %13 : vector<1x32xi1> to vector<1x32xi1>
    %31 = vector.broadcast %30 : vector<1x32xi1> to vector<16x32xi1>
    %32 = vector.broadcast %cst_12 : f32 to vector<16x32xf32>
    %33 = arith.select %31, %8, %32 : vector<16x32xi1>, vector<16x32xf32>
    %cst_13 = arith.constant dense<0xFF800000> : vector<16xf32>
    %34 = vector.multi_reduction <maximumf>, %33, %cst_13 [1] : vector<16x32xf32> to vector<16xf32>
    %35 = vector.shape_cast %34 : vector<16xf32> to vector<16x1xf32>
    %36 = vector.broadcast %35 : vector<16x1xf32> to vector<16x32xf32>
    %37 = arith.subf %8, %36 : vector<16x32xf32>
    %cst_14 = arith.constant 0xFF800000 : f32
    %38 = vector.shape_cast %13 : vector<1x32xi1> to vector<1x32xi1>
    %39 = vector.broadcast %38 : vector<1x32xi1> to vector<16x32xi1>
    %40 = vector.broadcast %cst_14 : f32 to vector<16x32xf32>
    %41 = arith.select %39, %37, %40 : vector<16x32xi1>, vector<16x32xf32>
    %42 = math.exp %41 : vector<16x32xf32>
    %cst_15 = arith.constant dense<0.000000e+00> : vector<16xf32>
    %43 = vector.multi_reduction <add>, %42, %cst_15 [1] : vector<16x32xf32> to vector<16xf32>
    %44 = vector.shape_cast %43 : vector<16xf32> to vector<16x1xf32>
    %45 = math.log %44 : vector<16x1xf32>
    %46 = arith.addf %35, %45 : vector<16x1xf32>
    %c16_i32_16 = arith.constant 16 : i32
    %47 = vector.broadcast %c16_i32_16 : i32 to vector<16x1xi32>
    %48 = arith.addi %9, %47 : vector<16x1xi32>
    %49 = vector.broadcast %10 : vector<1x32xi32> to vector<16x32xi32>
    %50 = vector.broadcast %48 : vector<16x1xi32> to vector<16x32xi32>
    %51 = arith.cmpi eq, %49, %50 : vector<16x32xi32>
    %cst_17 = arith.constant 0.000000e+00 : f32
    %52 = vector.broadcast %cst_17 : f32 to vector<16x32xf32>
    %53 = arith.select %51, %8, %52 : vector<16x32xi1>, vector<16x32xf32>
    %cst_18 = arith.constant dense<0.000000e+00> : vector<16xf32>
    %54 = vector.multi_reduction <add>, %53, %cst_18 [1] : vector<16x32xf32> to vector<16xf32>
    %55 = vector.shape_cast %54 : vector<16xf32> to vector<16x1xf32>
    %c16_i32_19 = arith.constant 16 : i32
    %56 = vector.broadcast %c16_i32_19 : i32 to vector<16x1xi32>
    %57 = arith.addi %29, %56 : vector<16x1xi32>
    %58 = vector.broadcast %10 : vector<1x32xi32> to vector<16x32xi32>
    %59 = vector.broadcast %57 : vector<16x1xi32> to vector<16x32xi32>
    %60 = arith.cmpi eq, %58, %59 : vector<16x32xi32>
    %cst_20 = arith.constant 0.000000e+00 : f32
    %61 = vector.broadcast %cst_20 : f32 to vector<16x32xf32>
    %62 = arith.select %60, %8, %61 : vector<16x32xi1>, vector<16x32xf32>
    %cst_21 = arith.constant dense<0.000000e+00> : vector<16xf32>
    %63 = vector.multi_reduction <add>, %62, %cst_21 [1] : vector<16x32xf32> to vector<16xf32>
    %64 = vector.shape_cast %63 : vector<16xf32> to vector<16x1xf32>
    %65 = arith.subf %46, %55 : vector<16x1xf32>
    %66 = arith.subf %46, %64 : vector<16x1xf32>
    %67 = arith.cmpi eq, %29, %9 : vector<16x1xi32>
    %c0_22 = arith.constant 0 : index
    %c0_23 = arith.constant 0 : index
    %68 = vector.load %arg6[%c0_22, %c0_23] : memref<16x1xf32, #tpu.memory_space<vmem>>, vector<16x1xf32>
    %69 = arith.addf %68, %65 : vector<16x1xf32>
    %c0_24 = arith.constant 0 : index
    %c0_25 = arith.constant 0 : index
    %70 = vector.load %arg6[%c0_24, %c0_25] : memref<16x1xf32, #tpu.memory_space<vmem>>, vector<16x1xf32>
    tpu.vector_store %arg6[%c0_24, %c0_25], %69 {strides = array<i32>} : memref<16x1xf32, #tpu.memory_space<vmem>>, vector<16x1xf32>,
    %c0_26 = arith.constant 0 : index
    %c0_27 = arith.constant 0 : index
    %71 = vector.load %arg7[%c0_26, %c0_27] : memref<16x1xf32, #tpu.memory_space<vmem>>, vector<16x1xf32>
    %cst_28 = arith.constant 0.000000e+00 : f32
    %72 = vector.broadcast %cst_28 : f32 to vector<16x1xf32>
    %73 = arith.select %67, %66, %72 : vector<16x1xi1>, vector<16x1xf32>
    %74 = arith.addf %71, %73 : vector<16x1xf32>
    %c0_29 = arith.constant 0 : index
    %c0_30 = arith.constant 0 : index
    %75 = vector.load %arg7[%c0_29, %c0_30] : memref<16x1xf32, #tpu.memory_space<vmem>>, vector<16x1xf32>
    tpu.vector_store %arg7[%c0_29, %c0_30], %74 {strides = array<i32>} : memref<16x1xf32, #tpu.memory_space<vmem>>, vector<16x1xf32>,
    %c0_31 = arith.constant 0 : index
    %c0_32 = arith.constant 0 : index
    %76 = vector.load %arg8[%c0_31, %c0_32] : memref<16x1xf32, #tpu.memory_space<vmem>>, vector<16x1xf32>
    %77 = arith.extui %67 : vector<16x1xi1> to vector<16x1xi32>
    %78 = arith.sitofp %77 : vector<16x1xi32> to vector<16x1xf32>
    %79 = arith.addf %76, %78 : vector<16x1xf32>
    %c0_33 = arith.constant 0 : index
    %c0_34 = arith.constant 0 : index
    %80 = vector.load %arg8[%c0_33, %c0_34] : memref<16x1xf32, #tpu.memory_space<vmem>>, vector<16x1xf32>
    tpu.vector_store %arg8[%c0_33, %c0_34], %79 {strides = array<i32>} : memref<16x1xf32, #tpu.memory_space<vmem>>, vector<16x1xf32>,
    %c0_i32_35 = arith.constant 0 : i32
    %81 = arith.cmpi eq, %arg0, %c0_i32_35 : i32
    %82 = arith.extui %81 : i1 to i32
    %c0_i32_36 = arith.constant 0 : i32
    %83 = arith.cmpi ne, %82, %c0_i32_36 : i32
    scf.if %83 {
      %c0_37 = arith.constant 0 : index
      %c0_38 = arith.constant 0 : index
      %84 = vector.load %arg6[%c0_37, %c0_38] : memref<16x1xf32, #tpu.memory_space<vmem>>, vector<16x1xf32>
      %85 = vector.shape_cast %84 : vector<16x1xf32> to vector<1x16x1xf32>
      %cst_39 = arith.constant dense<0.000000e+00> : vector<1xf32>
      %86 = vector.multi_reduction <add>, %85, %cst_39 [1, 2] : vector<1x16x1xf32> to vector<1xf32>
      %87 = vector.shape_cast %86 : vector<1xf32> to vector<1x1x1xf32>
      %88 = vector.extract %87[0, 0, 0] : f32 from vector<1x1x1xf32>
      %c0_40 = arith.constant 0 : index
      %c0_41 = arith.constant 0 : index
      %89 = vector.load %arg7[%c0_40, %c0_41] : memref<16x1xf32, #tpu.memory_space<vmem>>, vector<16x1xf32>
      %90 = vector.shape_cast %89 : vector<16x1xf32> to vector<1x16x1xf32>
      %cst_42 = arith.constant dense<0.000000e+00> : vector<1xf32>
      %91 = vector.multi_reduction <add>, %90, %cst_42 [1, 2] : vector<1x16x1xf32> to vector<1xf32>
      %92 = vector.shape_cast %91 : vector<1xf32> to vector<1x1x1xf32>
      %93 = vector.extract %92[0, 0, 0] : f32 from vector<1x1x1xf32>
      %c0_43 = arith.constant 0 : index
      %c0_44 = arith.constant 0 : index
      %94 = vector.load %arg8[%c0_43, %c0_44] : memref<16x1xf32, #tpu.memory_space<vmem>>, vector<16x1xf32>
      %95 = vector.shape_cast %94 : vector<16x1xf32> to vector<1x16x1xf32>
      %cst_45 = arith.constant dense<0.000000e+00> : vector<1xf32>
      %96 = vector.multi_reduction <add>, %95, %cst_45 [1, 2] : vector<1x16x1xf32> to vector<1xf32>
      %97 = vector.shape_cast %96 : vector<1xf32> to vector<1x1x1xf32>
      %98 = vector.extract %97[0, 0, 0] : f32 from vector<1x1x1xf32>
      %cst_46 = arith.constant 1.600000e+01 : f32
      %99 = arith.divf %88, %cst_46 : f32
      %cst_47 = arith.constant 0.000000e+00 : f32
      %100 = arith.cmpf ogt, %98, %cst_47 : f32
      %cst_48 = arith.constant 1.000000e+00 : f32
      %101 = arith.maximumf %98, %cst_48 : f32
      %102 = arith.divf %93, %101 : f32
      %cst_49 = arith.constant 0.000000e+00 : f32
      %103 = arith.select %100, %102, %cst_49 : f32
      %cst_50 = arith.constant 5.000000e-01 : f32
      %104 = arith.mulf %cst_50, %103 : f32
      %105 = arith.addf %99, %104 : f32
      %c0_51 = arith.constant 0 : index
      %c0_52 = arith.constant 0 : index
      %106 = memref.load %arg5[%c0_51, %c0_52] : memref<1x1xf32, #tpu.memory_space<smem>>
      memref.store %105, %arg5[%c0_51, %c0_52] : memref<1x1xf32, #tpu.memory_space<smem>>
    } else {
    }
    return
  }
  func.func @transform_0(%arg0: i32) -> (i32, i32) {
    %c0_i32 = arith.constant 0 : i32
    %c0_i32_0 = arith.constant 0 : i32
    return %arg0, %c0_i32 : i32, i32
  }
  func.func @transform_1(%arg0: i32) -> (i32, i32) {
    %c0_i32 = arith.constant 0 : i32
    %c0_i32_0 = arith.constant 0 : i32
    return %arg0, %c0_i32 : i32, i32
  }
  func.func @transform_2(%arg0: i32) -> (i32, i32) {
    %c0_i32 = arith.constant 0 : i32
    %c0_i32_0 = arith.constant 0 : i32
    %c0_i32_1 = arith.constant 0 : i32
    return %c0_i32, %c0_i32_0 : i32, i32
  }
  func.func @transform_3(%arg0: i32) -> (i32, i32) {
    %c0_i32 = arith.constant 0 : i32
    %c0_i32_0 = arith.constant 0 : i32
    %c0_i32_1 = arith.constant 0 : i32
    return %c0_i32, %c0_i32_0 : i32, i32
  }
  func.func @transform_4(%arg0: i32) -> (i32, i32) {
    %c0_i32 = arith.constant 0 : i32
    %c0_i32_0 = arith.constant 0 : i32
    %c0_i32_1 = arith.constant 0 : i32
    return %c0_i32, %c0_i32_0 : i32, i32
  }
}

</mosaic_0001>

<llo_original>
// kernel: tpu_custom_call.1
$region0: #{tpu_custom_call.1}
  #allocation0 [shape = 'u32[]', space=smem, size = 0x4, offset = 0x4, fixed_abs, tag = 'smem constant byte address 0x4 - core index']
  #allocation1 [shape = 'u32[144,128]{1,0:T(1,128)}', space=vmem, size = 0x12000, scoped, tag = 'internal scratch']
  #allocation2 [shape = 'f32[16,1]{1,0:T(8,128)}', space=vmem, size = 0x2000, scoped, tag = 'scratch operand']
  #allocation3 [shape = 'f32[16,1]{1,0:T(8,128)}', space=vmem, size = 0x2000, scoped, tag = 'scratch operand']
  #allocation4 [shape = 'f32[16,1]{1,0:T(8,128)}', space=vmem, size = 0x2000, scoped, tag = 'scratch operand']
  %s0 = inlined_call_operand.vmem [shape: bf16[16,32], index: 0, kind: input, shape index: {}]
  %s1 = inlined_call_operand.vmem [shape: s32[16,1], index: 1, kind: input, shape index: {}]
  %s2 = inlined_call_operand.vmem [shape: bf16[32,32], index: 2, kind: input, shape index: {}]
  %s3 = inlined_call_operand.vmem [shape: f32[1,32], index: 3, kind: input, shape index: {}]
  %s4 = inlined_call_operand.hbm [shape: f32[1,1], index: 4, kind: output, shape index: {}]
  %s5 = sld [smem:[#allocation0]]
  $region34: #{tpu_custom_call.1} parent=0
    _
  %s7 = ssub.s32 1, %s5
  %s8 = scalar_select 0, %s7, %s5
  $region1: #{tpu_custom_call.1} parent=0
    #allocation5 [shape = 'u8[512]{0}', space=smem, size = 0x200, scoped, tag = 'output window, operand 0, single buffered']
    #allocation6 [shape = 's32[1]{0}', space=sflag, size = 0x4, scoped, tag = 'scoped memory for tpu_custom_call.1']
    %9 = vsyncpa [#allocation6], 0
    // Predicated region
    $region2: #{tpu_custom_call.1} parent=1 // pred_check
      _
    $region3: #{tpu_custom_call.1} parent=1 // pred_check_branch
      %11 = sbr.rel (0) target = $region5
    $region4: #{tpu_custom_call.1} parent=1 // pred_region
      _
    $region5: #{tpu_custom_call.1} parent=1 // pred_fallthru
      _
    // Predicated region
    $region6: #{tpu_custom_call.1} parent=1 // pred_check
      _
    $region7: #{tpu_custom_call.1} parent=1 // pred_check_branch
      %13 = sbr.rel (0) target = $region9
    $region8: #{tpu_custom_call.1} parent=1 // pred_region
      _
    $region9: #{tpu_custom_call.1} parent=1 // pred_fallthru
      _
    // Predicated region
    $region10: #{tpu_custom_call.1} parent=1 // pred_check
      _
    $region11: #{tpu_custom_call.1} parent=1 // pred_check_branch
      %15 = sbr.rel (0) target = $region13
    $region12: #{tpu_custom_call.1} parent=1 // pred_region
      _
    $region13: #{tpu_custom_call.1} parent=1 // pred_fallthru
      _
    // Predicated region
    $region14: #{tpu_custom_call.1} parent=1 // pred_check
      _
    $region15: #{tpu_custom_call.1} parent=1 // pred_check_branch
      %17 = sbr.rel (0) target = $region17
    $region16: #{tpu_custom_call.1} parent=1 // pred_region
      _
    $region17: #{tpu_custom_call.1} parent=1 // pred_fallthru
      _
    %p19 = scmp.eq.s32.totalorder 0, 0
    // Predicated region
    $region18: #{tpu_custom_call.1} parent=1 // pred_check
      %p20 = pneg %p19
    $region19: #{tpu_custom_call.1} parent=1 // pred_check_branch
      %22 = sbr.rel (%p20) target = $region21
    $region20: #{tpu_custom_call.1} parent=1 // pred_region
      %vm23 = vcmask 7168
      %24 = vst.msk [vmem:[#allocation2] sm:$0xff] %vm23, 0.0
      %25 = vst.msk [vmem:[#allocation2 + $0x8] sm:$0xff] %vm23, 0.0
      %26 = vst.msk [vmem:[#allocation3] sm:$0xff] %vm23, 0.0
      %27 = vst.msk [vmem:[#allocation3 + $0x8] sm:$0xff] %vm23, 0.0
      %28 = vst.msk [vmem:[#allocation4] sm:$0xff] %vm23, 0.0
      %29 = vst.msk [vmem:[#allocation4 + $0x8] sm:$0xff] %vm23, 0.0
    $region21: #{tpu_custom_call.1} parent=1 // pred_fallthru
      _
    %v30 = vld [vmem:[%s0] sm:$0xf]
    %v31 = vld [vmem:[%s0 + $0x4] sm:$0xf]
    %v32 = vld [vmem:[%s2] sm:$0xf]
    %v33 = vld [vmem:[%s2 + $0x4] sm:$0xf]
    %v34 = vld [vmem:[%s2 + $0x8] sm:$0xf]
    %v35 = vld [vmem:[%s2 + $0xc] sm:$0xf]
    %v36 = vld [vmem:[%s3] sm:$0x1]
    %v38 = vlaneseq
    %v39 = vshrl.u32 %v38, 7
    %v40 = vsub.s32 0, %v39
    %v41 = vrot.slane %v36, %v40
    %v45 = vunpack.c.l.b16 %v30
    %v46 = vunpack.c.l.b16 %v31
    %v47 = vpack.c.b16 %v46, %v45
    %v52 = vunpack.c.l.b16 %v32
    %v53 = vunpack.c.l.b16 %v33
    %v54 = vunpack.c.l.b16 %v34
    %v55 = vunpack.c.l.b16 %v35
    %v56 = vpack.c.b16 %v53, %v52
    %v57 = vpack.c.b16 %v55, %v54
    %vm60 = vcmask 261120
    %v62 = vsel %vm60, %v47, 0
    %64 = vmatprep.subr.bf16.mxu0 0
    %65 = vmatpush1.bf16.msra.mxu0 %v56
    %66 = vmatprep.subr.bf16.mxu0 0
    %67 = vmatpush1.bf16.msra.mxu0 %v57
    %68 = vmatprep.subr.bf16.mxu0 0
    %69 = vmatpush1.bf16.msra.mxu0 0
    %70 = vmatprep.subr.bf16.mxu0 0
    %71 = vmatpush1.bf16.msra.mxu0 0
    %72 = vmatprep.subr.bf16.mxu0 0
    %73 = vmatpush1.bf16.msra.mxu0 0
    %74 = vmatprep.subr.bf16.mxu0 0
    %75 = vmatpush1.bf16.msra.mxu0 0
    %76 = vmatprep.subr.bf16.mxu0 0
    %77 = vmatpush1.bf16.msra.mxu0 0
    %78 = vmatprep.subr.bf16.mxu0 0
    %79 = vmatpush1.bf16.msra.mxu0 0
    %80 = vmatprep.subr.bf16.mxu0 0
    %81 = vmatpush1.bf16.msra.mxu0 0
    %82 = vmatprep.subr.bf16.mxu0 0
    %83 = vmatpush1.bf16.msra.mxu0 0
    %84 = vmatprep.subr.bf16.mxu0 0
    %85 = vmatpush1.bf16.msra.mxu0 0
    %86 = vmatprep.subr.bf16.mxu0 0
    %87 = vmatpush1.bf16.msra.mxu0 0
    %88 = vmatprep.subr.bf16.mxu0 0
    %89 = vmatpush1.bf16.msra.mxu0 0
    %90 = vmatprep.subr.bf16.mxu0 0
    %91 = vmatpush1.bf16.msra.mxu0 0
    %92 = vmatprep.subr.bf16.mxu0 0
    %93 = vmatpush1.bf16.msra.mxu0 0
    %94 = vmatprep.subr.bf16.mxu0 0
    %95 = vmatpush1.bf16.msra.mxu0 0
    %96 = vmatprep.mubr.bf16.mxu0 0
    %97 = vmatmul.mubr.bf16.gmra.mrb[0].mxu0 %v62
    %v98 = vpop.f32.mrb[0].mxu0
    %v99 = vadd.f32 %v41, %v98
    %v100 = vpop.f32.mrb[0].mxu0
    %v101 = vpop.f32.mrb[0].mxu0
    %v102 = vadd.f32 %v41, %v101
    %v103 = vpop.f32.mrb[0].mxu0
    %104 = vdwg.mxu0
    %v105 = vld [vmem:[%s1] sm:$0xff]
    %v106 = vld [vmem:[%s1 + $0x8] sm:$0xff]
    %v107 = vlaneseq
    %v108 = vand.u32 %v107, 127
    %vm109 = vcmp.lt.s32.totalorder %v108, 16
    %vm110 = vmxor %vm109, 1
    %v111 = vsel %vm109, 1, 0
    %vm112 = vcmp.eq.s32.totalorder %v111, 1
    %v113 = vsel %vm112, %v99, -inf
    %v114 = vsel %vm112, %v102, -inf
    %v115 = vsel %vm60, %v113, -inf
    %116 = vmax.xlane.f32.xlu0 %v115
    %v117 = vpop.xlane.xlu0 %116
    %v118 = vsel %vm60, %v114, -inf
    %119 = vmax.xlane.f32.xlu0 %v118
    %v120 = vpop.xlane.xlu0 %119
    %vm121 = vcmp.eq.f32.partialorder %v99, %v117
    %vm122 = vcmp.eq.f32.partialorder %v102, %v120
    %vm123 = vmand %vm112, %vm121
    %vm124 = vmand %vm112, %vm122
    %v125 = vsel %vm123, %v108, 32
    %v126 = vsel %vm124, %v108, 32
    %v127 = vsel %vm60, %v125, 2147483647
    %v128 = vand.u32 %v127, 65535
    %v129 = vshra.s32 %v127, 16
    %v130 = vcvt.s32.f32 %v128
    %v131 = vcvt.s32.f32 %v129
    %132 = vmin.xlane.f32.xlu0 %v131
    %v133 = vpop.xlane.xlu0 %132
    %vm134 = vcmp.eq.f32.partialorder %v131, %v133
    %v135 = vsel %vm134, %v130, inf
    %136 = vmin.xlane.f32.xlu0 %v135
    %v137 = vpop.xlane.xlu0 %136
    %v138 = vcvt.f32.s32 %v137
    %v139 = vcvt.f32.s32 %v133
    %v140 = vshll.u32 %v139, 16
    %v141 = vadd.s32 %v140, %v138
    %v142 = vsel %vm60, %v126, 2147483647
    %v143 = vand.u32 %v142, 65535
    %v144 = vshra.s32 %v142, 16
    %v145 = vcvt.s32.f32 %v143
    %v146 = vcvt.s32.f32 %v144
    %147 = vmin.xlane.f32.xlu0 %v146
    %v148 = vpop.xlane.xlu0 %147
    %vm149 = vcmp.eq.f32.partialorder %v146, %v148
    %v150 = vsel %vm149, %v145, inf
    %151 = vmin.xlane.f32.xlu0 %v150
    %v152 = vpop.xlane.xlu0 %151
    %v153 = vcvt.f32.s32 %v152
    %v154 = vcvt.f32.s32 %v148
    %v155 = vshll.u32 %v154, 16
    %v156 = vadd.s32 %v155, %v153
    %v157 = vsel %vm110, 1, 0
    %vm158 = vcmp.eq.s32.totalorder %v157, 1
    %v159 = vsel %vm158, %v99, -inf
    %v160 = vsel %vm158, %v102, -inf
    %v161 = vsel %vm60, %v159, -inf
    %162 = vmax.xlane.f32.xlu0 %v161
    %v163 = vpop.xlane.xlu0 %162
    %v164 = vsel %vm60, %v160, -inf
    %165 = vmax.xlane.f32.xlu0 %v164
    %v166 = vpop.xlane.xlu0 %165
    %v167 = vsub.f32 %v99, %v163
    %v168 = vsub.f32 %v102, %v166
    %v169 = vsel %vm158, %v167, -inf
    %v170 = vsel %vm158, %v168, -inf
    %v171 = vmul.f32 %v169, 1.442695
    %v172 = vpow.pop %v171
    %v173 = vmul.f32 %v170, 1.442695
    %v174 = vpow.pop %v173
    %v175 = vsel %vm60, %v172, 0.0
    %176 = vadd.xlane.f32.xlu0 %v175
    %v177 = vpop.xlane.xlu0 %176
    %v178 = vsel %vm60, %v174, 0.0
    %179 = vadd.xlane.f32.xlu0 %v178
    %v180 = vpop.xlane.xlu0 %179
    %v181 = vlog2.pop %v177
    %v182 = vmul.f32 %v181, 0.6931472
    %v183 = vlog2.pop %v180
    %v184 = vmul.f32 %v183, 0.6931472
    %v185 = vadd.f32 %v163, %v182
    %v186 = vadd.f32 %v166, %v184
    %v187 = vadd.s32 %v105, 16
    %v188 = vadd.s32 %v106, 16
    %189 = vset.pattern.permute.xlu0 0
    %190 = vperm.xlu0 %189, %v187
    %v191 = vpop.permute.xlu0 %190
    %192 = vset.pattern.permute.xlu0 0
    %193 = vperm.xlu0 %192, %v188
    %v194 = vpop.permute.xlu0 %193
    %vm195 = vcmp.eq.s32.totalorder %v108, %v191
    %vm196 = vcmp.eq.s32.totalorder %v108, %v194
    %v197 = vsel %vm195, %v99, 0.0
    %v198 = vsel %vm196, %v102, 0.0
    %v199 = vsel %vm60, %v197, 0.0
    %200 = vadd.xlane.f32.xlu0 %v199
    %v201 = vpop.xlane.xlu0 %200
    %v202 = vsel %vm60, %v198, 0.0
    %203 = vadd.xlane.f32.xlu0 %v202
    %v204 = vpop.xlane.xlu0 %203
    %v205 = vadd.s32 %v141, 16
    %v206 = vadd.s32 %v156, 16
    %vm207 = vcmp.eq.s32.totalorder %v108, %v205
    %vm208 = vcmp.eq.s32.totalorder %v108, %v206
    %v209 = vsel %vm207, %v99, 0.0
    %v210 = vsel %vm208, %v102, 0.0
    %v211 = vsel %vm60, %v209, 0.0
    %212 = vadd.xlane.f32.xlu0 %v211
    %v213 = vpop.xlane.xlu0 %212
    %v214 = vsel %vm60, %v210, 0.0
    %215 = vadd.xlane.f32.xlu0 %v214
    %v216 = vpop.xlane.xlu0 %215
    %v217 = vsub.f32 %v185, %v201
    %v218 = vsub.f32 %v186, %v204
    %v219 = vsub.f32 %v185, %v213
    %v220 = vsub.f32 %v186, %v216
    %vm221 = vcmp.eq.s32.totalorder %v141, %v105
    %vm222 = vcmp.eq.s32.totalorder %v156, %v106
    %v223 = vld [vmem:[#allocation2] sm:$0xff]
    %v224 = vld [vmem:[#allocation2 + $0x8] sm:$0xff]
    %v225 = vadd.f32 %v223, %v217
    %v226 = vadd.f32 %v224, %v218
    %vm227 = vcmask 7168
    %228 = vst.msk [vmem:[#allocation2] sm:$0xff] %vm227, %v225
    %229 = vst.msk [vmem:[#allocation2 + $0x8] sm:$0xff] %vm227, %v226
    %v230 = vld [vmem:[#allocation3] sm:$0xff]
    %v231 = vld [vmem:[#allocation3 + $0x8] sm:$0xff]
    %v232 = vsel %vm221, %v219, 0.0
    %v233 = vsel %vm222, %v220, 0.0
    %v234 = vadd.f32 %v230, %v232
    %v235 = vadd.f32 %v231, %v233
    %236 = vst.msk [vmem:[#allocation3] sm:$0xff] %vm227, %v234
    %237 = vst.msk [vmem:[#allocation3 + $0x8] sm:$0xff] %vm227, %v235
    %v238 = vld [vmem:[#allocation4] sm:$0xff]
    %v239 = vld [vmem:[#allocation4 + $0x8] sm:$0xff]
    %v240 = vsel %vm221, 1, 0
    %v241 = vsel %vm222, 1, 0
    %v242 = vcvt.s32.f32 %v240
    %v243 = vcvt.s32.f32 %v241
    %v244 = vadd.f32 %v238, %v242
    %v245 = vadd.f32 %v239, %v243
    %246 = vst.msk [vmem:[#allocation4] sm:$0xff] %vm227, %v244
    %247 = vst.msk [vmem:[#allocation4 + $0x8] sm:$0xff] %vm227, %v245
    // Predicated region
    $region22: #{tpu_custom_call.1} parent=1 // pred_check
      %p248 = pneg %p19
    $region23: #{tpu_custom_call.1} parent=1 // pred_check_branch
      %250 = sbr.rel (%p248) target = $region25
    $region24: #{tpu_custom_call.1} parent=1 // pred_region
      %v251 = vld [vmem:[#allocation2] sm:$0xff]
      %v252 = vld [vmem:[#allocation2 + $0x8] sm:$0xff]
      %v253 = vsel %vm227, %v251, 0.0
      %v254 = vsel %vm227, %v252, 0.0
      %v255 = vadd.f32 %v253, %v254
      %256 = vadd.xlane.f32.xlu0 %v255
      %v257 = vpop.xlane.xlu0 %256
      %v258 = vrot.slane %v257, 4
      %v259 = vadd.f32 %v257, %v258
      %v260 = vrot.slane %v259, 2
      %v261 = vadd.f32 %v259, %v260
      %v262 = vrot.slane %v261, 1
      %v263 = vadd.f32 %v261, %v262
      %s264 = vtos %v263
      %v265 = vld [vmem:[#allocation3] sm:$0xff]
      %v266 = vld [vmem:[#allocation3 + $0x8] sm:$0xff]
      %v267 = vsel %vm227, %v265, 0.0
      %v268 = vsel %vm227, %v266, 0.0
      %v269 = vadd.f32 %v267, %v268
      %270 = vadd.xlane.f32.xlu0 %v269
      %v271 = vpop.xlane.xlu0 %270
      %v272 = vrot.slane %v271, 4
      %v273 = vadd.f32 %v271, %v272
      %v274 = vrot.slane %v273, 2
      %v275 = vadd.f32 %v273, %v274
      %v276 = vrot.slane %v275, 1
      %v277 = vadd.f32 %v275, %v276
      %s278 = vtos %v277
      %v279 = vld [vmem:[#allocation4] sm:$0xff]
      %v280 = vld [vmem:[#allocation4 + $0x8] sm:$0xff]
      %v281 = vsel %vm227, %v279, 0.0
      %v282 = vsel %vm227, %v280, 0.0
      %v283 = vadd.f32 %v281, %v282
      %284 = vadd.xlane.f32.xlu0 %v283
      %v285 = vpop.xlane.xlu0 %284
      %v286 = vrot.slane %v285, 4
      %v287 = vadd.f32 %v285, %v286
      %v288 = vrot.slane %v287, 2
      %v289 = vadd.f32 %v287, %v288
      %v290 = vrot.slane %v289, 1
      %v291 = vadd.f32 %v289, %v290
      %s292 = vtos %v291
      %v293 = vrcp.pop 16.0
      %s294 = vtos %v293
      %s295 = smul.f32 %s264, %s294
      %p296 = scmp.gt.f32.partialorder %s292, 0.0
      %s297 = smax.f32 %s292, 1.0
      %v298 = vstv %s297
      %v299 = vrcp.pop %v298
      %s300 = vtos %v299
      %s301 = smul.f32 %s278, %s300
      %s302 = scalar_select %p296, %s301, 0.0
      %s303 = smul.f32 %s302, 0.5
      %s304 = sadd.f32 %s295, %s303
      %s305 = scalar_lea.smem [#allocation5], 0
      %306 = sst [smem:[%s305]] %s304
    $region25: #{tpu_custom_call.1} parent=1 // pred_fallthru
      _
    // Predicated region
    $region26: #{tpu_custom_call.1} parent=1 // pred_check
      _
    $region27: #{tpu_custom_call.1} parent=1 // pred_check_branch
      %308 = sbr.rel (0) target = $region29
    $region28: #{tpu_custom_call.1} parent=1 // pred_region
      %s310 = ssub.s32 16, 16
      %311 = vsyncadd [#allocation6], %s310
      %314 = dma.smem_to_hbm [#allocation5], 16, %s4, [#allocation6]
    $region29: #{tpu_custom_call.1} parent=1 // pred_fallthru
      _
    // Predicated region
    $region30: #{tpu_custom_call.1} parent=1 // pred_check
      _
    $region31: #{tpu_custom_call.1} parent=1 // pred_check_branch
      %316 = sbr.rel (0) target = $region33
    $region32: #{tpu_custom_call.1} parent=1 // pred_region
      %317 = dma.done [#allocation6], 16
    $region33: #{tpu_custom_call.1} parent=1 // pred_fallthru
      _
    %318 = sfence
    %319 = vsyncpa [#allocation6], 1

// kernel: tpu_custom_call.1
$region0: #{tpu_custom_call.1}
  #allocation0 [shape = 'u32[]', space=smem, size = 0x4, offset = 0x4, fixed_abs, tag = 'smem constant byte address 0x4 - core index']
  #allocation1 [shape = 'u32[144,128]{1,0:T(1,128)}', space=vmem, size = 0x12000, scoped, tag = 'internal scratch']
  #allocation2 [shape = 'f32[16,1]{1,0:T(8,128)}', space=vmem, size = 0x2000, scoped, tag = 'scratch operand']
  #allocation3 [shape = 'f32[16,1]{1,0:T(8,128)}', space=vmem, size = 0x2000, scoped, tag = 'scratch operand']
  #allocation4 [shape = 'f32[16,1]{1,0:T(8,128)}', space=vmem, size = 0x2000, scoped, tag = 'scratch operand']
  %s0 = inlined_call_operand.vmem [shape: bf16[16,32], index: 0, kind: input, shape index: {}]
  %s1 = inlined_call_operand.vmem [shape: s32[16,1], index: 1, kind: input, shape index: {}]
  %s2 = inlined_call_operand.vmem [shape: bf16[32,32], index: 2, kind: input, shape index: {}]
  %s3 = inlined_call_operand.vmem [shape: f32[1,32], index: 3, kind: input, shape index: {}]
  %s4 = inlined_call_operand.hbm [shape: f32[1,1], index: 4, kind: output, shape index: {}]
  %s5 = sld [smem:[#allocation0]]
  $region34: #{tpu_custom_call.1} parent=0
    _
  %s7 = ssub.s32 1, %s5
  %s8 = scalar_select 0, %s7, %s5
  $region1: #{tpu_custom_call.1} parent=0
    #allocation5 [shape = 'u8[512]{0}', space=smem, size = 0x200, scoped, tag = 'output window, operand 0, single buffered']
    #allocation6 [shape = 's32[1]{0}', space=sflag, size = 0x4, scoped, tag = 'scoped memory for tpu_custom_call.1']
    %9 = vsyncpa [#allocation6], 0
    // Predicated region
    $region2: #{tpu_custom_call.1} parent=1 // pred_check
      _
    $region3: #{tpu_custom_call.1} parent=1 // pred_check_branch
      %11 = sbr.rel (0) target = $region5
    $region4: #{tpu_custom_call.1} parent=1 // pred_region
      _
    $region5: #{tpu_custom_call.1} parent=1 // pred_fallthru
      _
    // Predicated region
    $region6: #{tpu_custom_call.1} parent=1 // pred_check
      _
    $region7: #{tpu_custom_call.1} parent=1 // pred_check_branch
      %13 = sbr.rel (0) target = $region9
    $region8: #{tpu_custom_call.1} parent=1 // pred_region
      _
    $region9: #{tpu_custom_call.1} parent=1 // pred_fallthru
      _
    // Predicated region
    $region10: #{tpu_custom_call.1} parent=1 // pred_check
      _
    $region11: #{tpu_custom_call.1} parent=1 // pred_check_branch
      %15 = sbr.rel (0) target = $region13
    $region12: #{tpu_custom_call.1} parent=1 // pred_region
      _
    $region13: #{tpu_custom_call.1} parent=1 // pred_fallthru
      _
    // Predicated region
    $region14: #{tpu_custom_call.1} parent=1 // pred_check
      _
    $region15: #{tpu_custom_call.1} parent=1 // pred_check_branch
      %17 = sbr.rel (0) target = $region17
    $region16: #{tpu_custom_call.1} parent=1 // pred_region
      _
    $region17: #{tpu_custom_call.1} parent=1 // pred_fallthru
      _
    %p19 = scmp.eq.s32.totalorder 0, 0
    // Predicated region
    $region18: #{tpu_custom_call.1} parent=1 // pred_check
      %p20 = pneg %p19
    $region19: #{tpu_custom_call.1} parent=1 // pred_check_branch
      %22 = sbr.rel (%p20) target = $region21
    $region20: #{tpu_custom_call.1} parent=1 // pred_region
      %vm23 = vcmask 7168
      %24 = vst.msk [vmem:[#allocation2] sm:$0xff] %vm23, 0.0
      %25 = vst.msk [vmem:[#allocation2 + $0x8] sm:$0xff] %vm23, 0.0
      %26 = vst.msk [vmem:[#allocation3] sm:$0xff] %vm23, 0.0
      %27 = vst.msk [vmem:[#allocation3 + $0x8] sm:$0xff] %vm23, 0.0
      %28 = vst.msk [vmem:[#allocation4] sm:$0xff] %vm23, 0.0
      %29 = vst.msk [vmem:[#allocation4 + $0x8] sm:$0xff] %vm23, 0.0
    $region21: #{tpu_custom_call.1} parent=1 // pred_fallthru
      _
    %v30 = vld [vmem:[%s0] sm:$0xf]
    %v31 = vld [vmem:[%s0 + $0x4] sm:$0xf]
    %v32 = vld [vmem:[%s2] sm:$0xf]
    %v33 = vld [vmem:[%s2 + $0x4] sm:$0xf]
    %v34 = vld [vmem:[%s2 + $0x8] sm:$0xf]
    %v35 = vld [vmem:[%s2 + $0xc] sm:$0xf]
    %v36 = vld [vmem:[%s3] sm:$0x1]
    %v38 = vlaneseq
    %v39 = vshrl.u32 %v38, 7
    %v40 = vsub.s32 0, %v39
    %v41 = vrot.slane %v36, %v40
    %v45 = vunpack.c.l.b16 %v30
    %v46 = vunpack.c.l.b16 %v31
    %v47 = vpack.c.b16 %v46, %v45
    %v52 = vunpack.c.l.b16 %v32
    %v53 = vunpack.c.l.b16 %v33
    %v54 = vunpack.c.l.b16 %v34
    %v55 = vunpack.c.l.b16 %v35
    %v56 = vpack.c.b16 %v53, %v52
    %v57 = vpack.c.b16 %v55, %v54
    %vm60 = vcmask 261120
    %v62 = vsel %vm60, %v47, 0
    %64 = vmatprep.subr.bf16.mxu0 0
    %65 = vmatpush1.bf16.msra.mxu0 %v56
    %66 = vmatprep.subr.bf16.mxu0 0
    %67 = vmatpush1.bf16.msra.mxu0 %v57
    %68 = vmatprep.subr.bf16.mxu0 0
    %69 = vmatpush1.bf16.msra.mxu0 0
    %70 = vmatprep.subr.bf16.mxu0 0
    %71 = vmatpush1.bf16.msra.mxu0 0
    %72 = vmatprep.subr.bf16.mxu0 0
    %73 = vmatpush1.bf16.msra.mxu0 0
    %74 = vmatprep.subr.bf16.mxu0 0
    %75 = vmatpush1.bf16.msra.mxu0 0
    %76 = vmatprep.subr.bf16.mxu0 0
    %77 = vmatpush1.bf16.msra.mxu0 0
    %78 = vmatprep.subr.bf16.mxu0 0
    %79 = vmatpush1.bf16.msra.mxu0 0
    %80 = vmatprep.subr.bf16.mxu0 0
    %81 = vmatpush1.bf16.msra.mxu0 0
    %82 = vmatprep.subr.bf16.mxu0 0
    %83 = vmatpush1.bf16.msra.mxu0 0
    %84 = vmatprep.subr.bf16.mxu0 0
    %85 = vmatpush1.bf16.msra.mxu0 0
    %86 = vmatprep.subr.bf16.mxu0 0
    %87 = vmatpush1.bf16.msra.mxu0 0
    %88 = vmatprep.subr.bf16.mxu0 0
    %89 = vmatpush1.bf16.msra.mxu0 0
    %90 = vmatprep.subr.bf16.mxu0 0
    %91 = vmatpush1.bf16.msra.mxu0 0
    %92 = vmatprep.subr.bf16.mxu0 0
    %93 = vmatpush1.bf16.msra.mxu0 0
    %94 = vmatprep.subr.bf16.mxu0 0
    %95 = vmatpush1.bf16.msra.mxu0 0
    %96 = vmatprep.mubr.bf16.mxu0 0
    %97 = vmatmul.mubr.bf16.gmra.mrb[0].mxu0 %v62
    %v98 = vpop.f32.mrb[0].mxu0
    %v99 = vadd.f32 %v41, %v98
    %v100 = vpop.f32.mrb[0].mxu0
    %v101 = vpop.f32.mrb[0].mxu0
    %v102 = vadd.f32 %v41, %v101
    %v103 = vpop.f32.mrb[0].mxu0
    %104 = vdwg.mxu0
    %v105 = vld [vmem:[%s1] sm:$0xff]
    %v106 = vld [vmem:[%s1 + $0x8] sm:$0xff]
    %v107 = vlaneseq
    %v108 = vand.u32 %v107, 127
    %vm109 = vcmp.lt.s32.totalorder %v108, 16
    %vm110 = vmxor %vm109, 1
    %v111 = vsel %vm109, 1, 0
    %vm112 = vcmp.eq.s32.totalorder %v111, 1
    %v113 = vsel %vm112, %v99, -inf
    %v114 = vsel %vm112, %v102, -inf
    %v115 = vsel %vm60, %v113, -inf
    %116 = vmax.xlane.f32.xlu0 %v115
    %v117 = vpop.xlane.xlu0 %116
    %v118 = vsel %vm60, %v114, -inf
    %119 = vmax.xlane.f32.xlu0 %v118
    %v120 = vpop.xlane.xlu0 %119
    %vm121 = vcmp.eq.f32.partialorder %v99, %v117
    %vm122 = vcmp.eq.f32.partialorder %v102, %v120
    %vm123 = vmand %vm112, %vm121
    %vm124 = vmand %vm112, %vm122
    %v125 = vsel %vm123, %v108, 32
    %v126 = vsel %vm124, %v108, 32
    %v127 = vsel %vm60, %v125, 2147483647
    %v128 = vand.u32 %v127, 65535
    %v129 = vshra.s32 %v127, 16
    %v130 = vcvt.s32.f32 %v128
    %v131 = vcvt.s32.f32 %v129
    %132 = vmin.xlane.f32.xlu0 %v131
    %v133 = vpop.xlane.xlu0 %132
    %vm134 = vcmp.eq.f32.partialorder %v131, %v133
    %v135 = vsel %vm134, %v130, inf
    %136 = vmin.xlane.f32.xlu0 %v135
    %v137 = vpop.xlane.xlu0 %136
    %v138 = vcvt.f32.s32 %v137
    %v139 = vcvt.f32.s32 %v133
    %v140 = vshll.u32 %v139, 16
    %v141 = vadd.s32 %v140, %v138
    %v142 = vsel %vm60, %v126, 2147483647
    %v143 = vand.u32 %v142, 65535
    %v144 = vshra.s32 %v142, 16
    %v145 = vcvt.s32.f32 %v143
    %v146 = vcvt.s32.f32 %v144
    %147 = vmin.xlane.f32.xlu0 %v146
    %v148 = vpop.xlane.xlu0 %147
    %vm149 = vcmp.eq.f32.partialorder %v146, %v148
    %v150 = vsel %vm149, %v145, inf
    %151 = vmin.xlane.f32.xlu0 %v150
    %v152 = vpop.xlane.xlu0 %151
    %v153 = vcvt.f32.s32 %v152
    %v154 = vcvt.f32.s32 %v148
    %v155 = vshll.u32 %v154, 16
    %v156 = vadd.s32 %v155, %v153
    %v157 = vsel %vm110, 1, 0
    %vm158 = vcmp.eq.s32.totalorder %v157, 1
    %v159 = vsel %vm158, %v99, -inf
    %v160 = vsel %vm158, %v102, -inf
    %v161 = vsel %vm60, %v159, -inf
    %162 = vmax.xlane.f32.xlu0 %v161
    %v163 = vpop.xlane.xlu0 %162
    %v164 = vsel %vm60, %v160, -inf
    %165 = vmax.xlane.f32.xlu0 %v164
    %v166 = vpop.xlane.xlu0 %165
    %v167 = vsub.f32 %v99, %v163
    %v168 = vsub.f32 %v102, %v166
    %v169 = vsel %vm158, %v167, -inf
    %v170 = vsel %vm158, %v168, -inf
    %v171 = vmul.f32 %v169, 1.442695
    %v172 = vpow.pop %v171
    %v173 = vmul.f32 %v170, 1.442695
    %v174 = vpow.pop %v173
    %v175 = vsel %vm60, %v172, 0.0
    %176 = vadd.xlane.f32.xlu0 %v175
    %v177 = vpop.xlane.xlu0 %176
    %v178 = vsel %vm60, %v174, 0.0
    %179 = vadd.xlane.f32.xlu0 %v178
    %v180 = vpop.xlane.xlu0 %179
    %v181 = vlog2.pop %v177
    %v182 = vmul.f32 %v181, 0.6931472
    %v183 = vlog2.pop %v180
    %v184 = vmul.f32 %v183, 0.6931472
    %v185 = vadd.f32 %v163, %v182
    %v186 = vadd.f32 %v166, %v184
    %v187 = vadd.s32 %v105, 16
    %v188 = vadd.s32 %v106, 16
    %189 = vset.pattern.permute.xlu0 0
    %190 = vperm.xlu0 %189, %v187
    %v191 = vpop.permute.xlu0 %190
    %192 = vset.pattern.permute.xlu0 0
    %193 = vperm.xlu0 %192, %v188
    %v194 = vpop.permute.xlu0 %193
    %vm195 = vcmp.eq.s32.totalorder %v108, %v191
    %vm196 = vcmp.eq.s32.totalorder %v108, %v194
    %v197 = vsel %vm195, %v99, 0.0
    %v198 = vsel %vm196, %v102, 0.0
    %v199 = vsel %vm60, %v197, 0.0
    %200 = vadd.xlane.f32.xlu0 %v199
    %v201 = vpop.xlane.xlu0 %200
    %v202 = vsel %vm60, %v198, 0.0
    %203 = vadd.xlane.f32.xlu0 %v202
    %v204 = vpop.xlane.xlu0 %203
    %v205 = vadd.s32 %v141, 16
    %v206 = vadd.s32 %v156, 16
    %vm207 = vcmp.eq.s32.totalorder %v108, %v205
    %vm208 = vcmp.eq.s32.totalorder %v108, %v206
    %v209 = vsel %vm207, %v99, 0.0
    %v210 = vsel %vm208, %v102, 0.0
    %v211 = vsel %vm60, %v209, 0.0
    %212 = vadd.xlane.f32.xlu0 %v211
    %v213 = vpop.xlane.xlu0 %212
    %v214 = vsel %vm60, %v210, 0.0
    %215 = vadd.xlane.f32.xlu0 %v214
    %v216 = vpop.xlane.xlu0 %215
    %v217 = vsub.f32 %v185, %v201
    %v218 = vsub.f32 %v186, %v204
    %v219 = vsub.f32 %v185, %v213
    %v220 = vsub.f32 %v186, %v216
    %vm221 = vcmp.eq.s32.totalorder %v141, %v105
    %vm222 = vcmp.eq.s32.totalorder %v156, %v106
    %v223 = vld [vmem:[#allocation2] sm:$0xff]
    %v224 = vld [vmem:[#allocation2 + $0x8] sm:$0xff]
    %v225 = vadd.f32 %v223, %v217
    %v226 = vadd.f32 %v224, %v218
    %vm227 = vcmask 7168
    %228 = vst.msk [vmem:[#allocation2] sm:$0xff] %vm227, %v225
    %229 = vst.msk [vmem:[#allocation2 + $0x8] sm:$0xff] %vm227, %v226
    %v230 = vld [vmem:[#allocation3] sm:$0xff]
    %v231 = vld [vmem:[#allocation3 + $0x8] sm:$0xff]
    %v232 = vsel %vm221, %v219, 0.0
    %v233 = vsel %vm222, %v220, 0.0
    %v234 = vadd.f32 %v230, %v232
    %v235 = vadd.f32 %v231, %v233
    %236 = vst.msk [vmem:[#allocation3] sm:$0xff] %vm227, %v234
    %237 = vst.msk [vmem:[#allocation3 + $0x8] sm:$0xff] %vm227, %v235
    %v238 = vld [vmem:[#allocation4] sm:$0xff]
    %v239 = vld [vmem:[#allocation4 + $0x8] sm:$0xff]
    %v240 = vsel %vm221, 1, 0
    %v241 = vsel %vm222, 1, 0
    %v242 = vcvt.s32.f32 %v240
    %v243 = vcvt.s32.f32 %v241
    %v244 = vadd.f32 %v238, %v242
    %v245 = vadd.f32 %v239, %v243
    %246 = vst.msk [vmem:[#allocation4] sm:$0xff] %vm227, %v244
    %247 = vst.msk [vmem:[#allocation4 + $0x8] sm:$0xff] %vm227, %v245
    // Predicated region
    $region22: #{tpu_custom_call.1} parent=1 // pred_check
      %p248 = pneg %p19
    $region23: #{tpu_custom_call.1} parent=1 // pred_check_branch
      %250 = sbr.rel (%p248) target = $region25
    $region24: #{tpu_custom_call.1} parent=1 // pred_region
      %v251 = vld [vmem:[#allocation2] sm:$0xff]
      %v252 = vld [vmem:[#allocation2 + $0x8] sm:$0xff]
      %v253 = vsel %vm227, %v251, 0.0
      %v254 = vsel %vm227, %v252, 0.0
      %v255 = vadd.f32 %v253, %v254
      %256 = vadd.xlane.f32.xlu0 %v255
      %v257 = vpop.xlane.xlu0 %256
      %v258 = vrot.slane %v257, 4
      %v259 = vadd.f32 %v257, %v258
      %v260 = vrot.slane %v259, 2
      %v261 = vadd.f32 %v259, %v260
      %v262 = vrot.slane %v261, 1
      %v263 = vadd.f32 %v261, %v262
      %s264 = vtos %v263
      %v265 = vld [vmem:[#allocation3] sm:$0xff]
      %v266 = vld [vmem:[#allocation3 + $0x8] sm:$0xff]
      %v267 = vsel %vm227, %v265, 0.0
      %v268 = vsel %vm227, %v266, 0.0
      %v269 = vadd.f32 %v267, %v268
      %270 = vadd.xlane.f32.xlu0 %v269
      %v271 = vpop.xlane.xlu0 %270
      %v272 = vrot.slane %v271, 4
      %v273 = vadd.f32 %v271, %v272
      %v274 = vrot.slane %v273, 2
      %v275 = vadd.f32 %v273, %v274
      %v276 = vrot.slane %v275, 1
      %v277 = vadd.f32 %v275, %v276
      %s278 = vtos %v277
      %v279 = vld [vmem:[#allocation4] sm:$0xff]
      %v280 = vld [vmem:[#allocation4 + $0x8] sm:$0xff]
      %v281 = vsel %vm227, %v279, 0.0
      %v282 = vsel %vm227, %v280, 0.0
      %v283 = vadd.f32 %v281, %v282
      %284 = vadd.xlane.f32.xlu0 %v283
      %v285 = vpop.xlane.xlu0 %284
      %v286 = vrot.slane %v285, 4
      %v287 = vadd.f32 %v285, %v286
      %v288 = vrot.slane %v287, 2
      %v289 = vadd.f32 %v287, %v288
      %v290 = vrot.slane %v289, 1
      %v291 = vadd.f32 %v289, %v290
      %s292 = vtos %v291
      %v293 = vrcp.pop 16.0
      %s294 = vtos %v293
      %s295 = smul.f32 %s264, %s294
      %p296 = scmp.gt.f32.partialorder %s292, 0.0
      %s297 = smax.f32 %s292, 1.0
      %v298 = vstv %s297
      %v299 = vrcp.pop %v298
      %s300 = vtos %v299
      %s301 = smul.f32 %s278, %s300
      %s302 = scalar_select %p296, %s301, 0.0
      %s303 = smul.f32 %s302, 0.5
      %s304 = sadd.f32 %s295, %s303
      %s305 = scalar_lea.smem [#allocation5], 0
      %306 = sst [smem:[%s305]] %s304
    $region25: #{tpu_custom_call.1} parent=1 // pred_fallthru
      _
    // Predicated region
    $region26: #{tpu_custom_call.1} parent=1 // pred_check
      _
    $region27: #{tpu_custom_call.1} parent=1 // pred_check_branch
      %308 = sbr.rel (0) target = $region29
    $region28: #{tpu_custom_call.1} parent=1 // pred_region
      %s310 = ssub.s32 16, 16
      %311 = vsyncadd [#allocation6], %s310
      %314 = dma.smem_to_hbm [#allocation5], 16, %s4, [#allocation6]
    $region29: #{tpu_custom_call.1} parent=1 // pred_fallthru
      _
    // Predicated region
    $region30: #{tpu_custom_call.1} parent=1 // pred_check
      _
    $region31: #{tpu_custom_call.1} parent=1 // pred_check_branch
      %316 = sbr.rel (0) target = $region33
    $region32: #{tpu_custom_call.1} parent=1 // pred_region
      %317 = dma.done [#allocation6], 16
    $region33: #{tpu_custom_call.1} parent=1 // pred_fallthru
      _
    %318 = sfence
    %319 = vsyncpa [#allocation6], 1

</llo_original>
